<compile_context>
chip_gen: v7x
topology: tpu7x:2x2x1
jax: 0.10.0
libtpu: 0.0.40
codegen_flags: <defaults>
</compile_context>

<pallas_src>
import functools

import jax
import jax.numpy as jnp
from jax.experimental import pallas as pl
from jax.experimental.pallas import tpu as pltpu


def _cox_loss_kernel(se_ref, o_ref, m_carry, s_carry, tri_ref, *, inv_n):
    # se_ref : (2, 8, lanes) fused tile: [0] = sorted scores, [1] = events
    #          (row-major: sample index within tile = r * lanes + c)
    # o_ref  : (1, 1) resident accumulator -> mean Cox loss
    # m_carry, s_carry : (1, 1) VMEM scratch = running logsumexp state
    #          (max, scaled sum) over all samples in previous tiles
    # tri_ref: (lanes, lanes) VMEM scratch holding the upper-triangular ones
    #          matrix, built once at step 0 and reused by every step.
    b = pl.program_id(0)
    nb = pl.num_programs(0)
    rows = se_ref.shape[1]          # 8 sublanes per tile
    tile = se_ref.shape[2]          # lane width

    @pl.when(b == 0)
    def _init():
        m_carry[...] = jnp.full((1, 1), -jnp.inf, jnp.float32)
        s_carry[...] = jnp.zeros((1, 1), jnp.float32)
        o_ref[...] = jnp.zeros((1, 1), jnp.float32)
        # Build tri[q, p] = 1 iff q <= p ONCE (hoisted out of the per-step path).
        q_idx = jax.lax.broadcasted_iota(jnp.int32, (tile, tile), 0)
        p_idx = jax.lax.broadcasted_iota(jnp.int32, (tile, tile), 1)
        tri_ref[...] = (q_idx <= p_idx).astype(jnp.float32)

    s = se_ref[0]                                   # (8, tile) scores
    e = se_ref[1]                                   # (8, tile) events
    m_prev = m_carry[...]                           # (1, 1)
    sum_prev = s_carry[...]                         # (1, 1)

    # Running max over everything seen up to the end of this tile.
    m_rows = jnp.max(s, axis=1, keepdims=True)      # (8, 1)
    m_blk = jnp.max(m_rows, axis=0, keepdims=True)  # (1, 1)
    m_tot = jnp.maximum(m_prev, m_blk)              # (1, 1)

    # One exp per sample (O(n) transcendentals overall), stabilized by m_tot.
    ex = jnp.exp(s - m_tot)                         # (8, tile)

    # Within-row inclusive prefix sum on the MXU against the resident constant:
    #   csum[r, c] = sum_{c'<=c} ex[r, c']
    csum = jnp.dot(ex, tri_ref[...], preferred_element_type=jnp.float32)

    # Cross-row (sublane) exclusive offsets:
    #   rowoff[r] = sum of ex over all rows r' < r (earlier samples in this tile).
    r_i = jax.lax.broadcasted_iota(jnp.int32, (rows, rows), 0)
    r_j = jax.lax.broadcasted_iota(jnp.int32, (rows, rows), 1)
    l8 = (r_j < r_i).astype(jnp.float32)            # (8, 8) strict lower-tri
    cross = jnp.dot(l8, ex, preferred_element_type=jnp.float32)   # (8, tile)
    rowoff = jnp.sum(cross, axis=1, keepdims=True)  # (8, 1)

    # Fold in the carry from all previous tiles (rescaled to the new max).
    carry_scaled = sum_prev * jnp.exp(m_prev - m_tot)               # (1, 1)
    total = csum + rowoff + carry_scaled                            # (8, tile)
    # Floor to keep log() finite even for pathological (>~88) score ranges.
    total = jnp.maximum(total, jnp.float32(1e-37))

    # loss[i] = logsumexp(scores[:i+1]) - scores[i], event-weighted.
    loss = (m_tot + jnp.log(total) - s) * e                         # (8, tile)
    part = jnp.sum(jnp.sum(loss, axis=1, keepdims=True), axis=0, keepdims=True)
    o_ref[...] += part

    # Update the running logsumexp carry with this whole tile.
    blk_sum = jnp.sum(jnp.sum(ex, axis=1, keepdims=True), axis=0, keepdims=True)
    m_carry[...] = m_tot
    s_carry[...] = carry_scaled + blk_sum

    @pl.when(b == nb - 1)
    def _finalize():
        o_ref[...] = o_ref[...] * jnp.float32(inv_n)   # mean over the TRUE n


def baseline_cox_loss(scores, truth, *, lanes=None):
    """scores: (n, 1) float, truth: (n, 2) float with columns (E, T).

    lanes: lane width of one tile (multiple of 128). Each grid step covers
    8*lanes samples. If None, it is auto-sized so small cohorts use one small
    grid step and large cohorts use 4096-sample steps (same on v5e/v6e/v7x).
    """
    scores = scores.astype(jnp.float32)
    truth = truth.astype(jnp.float32)

    s = jnp.squeeze(scores, axis=1)          # (n,)
    events = truth[:, 0]                     # (n,)
    times = truth[:, 1]                      # (n,)

    # Stable sort by descending time T (matches Python's stable sorted(key=-T)).
    order = jnp.argsort(-times, stable=True)
    s_sorted = s[order]
    e_sorted = events[order]

    n = int(s_sorted.shape[0])
    rows = 8
    if lanes is None:
        lanes = min(512, max(128, ((n + rows * 128 - 1) // (rows * 128)) * 128))
    assert lanes % 128 == 0, "lanes must be a multiple of 128 (lane width)"

    per_tile = rows * lanes
    num_tiles = (n + per_tile - 1) // per_tile
    n_pad = num_tiles * per_tile

    # Padded rows: score = min real score (finite, never raises the running max),
    # event = 0 -> contribute nothing; they come after every true row so they
    # never enter a true row's risk set; the mean divides by the true n.
    pad_val = jnp.min(s_sorted)
    s_full = jnp.full((n_pad,), pad_val, jnp.float32).at[:n].set(s_sorted)
    e_full = jnp.zeros((n_pad,), jnp.float32).at[:n].set(e_sorted)

    # Fuse scores + events into ONE array: (2, num_tiles*8, lanes), row-major
    # sample order within each (8, lanes) tile.
    se = jnp.stack(
        [s_full.reshape(num_tiles * rows, lanes),
         e_full.reshape(num_tiles * rows, lanes)],
        axis=0,
    )

    kernel = functools.partial(_cox_loss_kernel, inv_n=1.0 / n)

    out = pl.pallas_call(
        kernel,
        out_shape=jax.ShapeDtypeStruct((1, 1), jnp.float32),
        grid=(num_tiles,),
        in_specs=[pl.BlockSpec((2, rows, lanes), lambda b: (0, b, 0))],
        out_specs=pl.BlockSpec((1, 1), lambda b: (0, 0)),
        scratch_shapes=[
            pltpu.VMEM((1, 1), jnp.float32),          # running max carry
            pltpu.VMEM((1, 1), jnp.float32),          # running scaled-sum carry
            pltpu.VMEM((lanes, lanes), jnp.float32),  # resident tri constant
        ],
        compiler_params=pltpu.CompilerParams(
            dimension_semantics=("arbitrary",),       # sequential carry over tiles
        ),
        cost_estimate=pl.CostEstimate(
            flops=num_tiles * (2 * rows * lanes * lanes
                               + 2 * rows * rows * lanes
                               + 12 * rows * lanes),
            transcendentals=2 * n_pad + 2 * num_tiles,
            bytes_accessed=2 * n_pad * 4 + 4,
        ),
    )(se)
    return out[0, 0]


def _reference_cox_loss(scores, truth):
    """Pure-JAX reference mirroring the PyTorch loop (vectorized, per-prefix max)."""
    s = jnp.squeeze(scores, axis=1)
    events = truth[:, 0]
    times = truth[:, 1]
    order = jnp.argsort(-times, stable=True)
    s = s[order]
    events = events[order]
    n = s.shape[0]
    mask = jnp.arange(n)[:, None] <= jnp.arange(n)[None, :]      # j <= i
    sj = jnp.where(mask, s[:, None], -jnp.inf)
    m = jnp.max(sj, axis=0)
    lse = m + jnp.log(jnp.sum(jnp.exp(sj - m), axis=0))
    loss = (lse - s) * events
    return jnp.mean(loss)


if __name__ == "__main__":
    # Test 1: tiny cohort (n=8) -> single grid step via auto lane selection,
    # exercises heavy tail padding inside one tile.
    k1, k2, k3 = jax.random.split(jax.random.PRNGKey(0), 3)
    n1 = 8
    scores1 = jax.random.normal(k1, (n1, 1), dtype=jnp.float32)
    events1 = (jax.random.uniform(k2, (n1,)) > 0.3).astype(jnp.float32)
    times1 = jax.random.uniform(k3, (n1,), minval=0.1, maxval=10.0)
    truth1 = jnp.stack([events1, times1], axis=1)            # (n, 2): (E, T)

    out1 = jax.block_until_ready(baseline_cox_loss(scores1, truth1))
    ref1 = jax.block_until_ready(_reference_cox_loss(scores1, truth1))
    assert jnp.allclose(out1, ref1, rtol=1e-4, atol=1e-5), (out1, ref1)

    # Test 2: n=1300 with lanes=128 -> 2 tiles of 1024 samples each; exercises
    # the cross-tile running-logsumexp carry, the cross-row (sublane) offsets,
    # and tail padding inside the last tile.
    k4, k5, k6 = jax.random.split(jax.random.PRNGKey(1), 3)
    n2 = 1300
    scores2 = jax.random.normal(k4, (n2, 1), dtype=jnp.float32)
    events2 = (jax.random.uniform(k5, (n2,)) > 0.3).astype(jnp.float32)
    times2 = jax.random.uniform(k6, (n2,), minval=0.1, maxval=10.0)
    truth2 = jnp.stack([events2, times2], axis=1)

    out2 = jax.block_until_ready(baseline_cox_loss(scores2, truth2, lanes=128))
    ref2 = jax.block_until_ready(_reference_cox_loss(scores2, truth2))
    assert jnp.allclose(out2, ref2, rtol=1e-4, atol=1e-4), (out2, ref2)

    print("KERNEL_OK")
</pallas_src>

<mosaic_0001>
module attributes {stable_mosaic.version = 11 : i64} {
  func.func @_cox_loss_kernel(%arg0: i32, %arg1: memref<2x8x128xf32, #tpu.memory_space<vmem>>, %arg2: memref<1x1xf32, #tpu.memory_space<vmem>>, %arg3: memref<1x1xf32, #tpu.memory_space<vmem>>, %arg4: memref<1x1xf32, #tpu.memory_space<vmem>>, %arg5: memref<128x128xf32, #tpu.memory_space<vmem>>) attributes {dimension_semantics = [#tpu.dimension_semantics<arbitrary>], iteration_bounds = array<i64: 1>, scalar_prefetch = 0 : i64, scratch_operands = 3 : i64, tpu.core_type = #tpu.core_type<tc>, window_params = [{transform_indices = @transform_0, window_bounds = array<i64: 2, 8, 128>}, {pipeline_mode = #tpu.pipeline_mode<synchronous>, transform_indices = @transform_1, window_bounds = array<i64: 1, 1>}]} {
    %c0_i32 = arith.constant 0 : i32
    %0 = arith.cmpi eq, %arg0, %c0_i32 : i32
    %1 = arith.extui %0 : i1 to i32
    %c0_i32_0 = arith.constant 0 : i32
    %2 = arith.cmpi ne, %1, %c0_i32_0 : i32
    scf.if %2 {
      %cst_30 = arith.constant 0xFF800000 : f32
      %58 = vector.broadcast %cst_30 : f32 to vector<1x1xf32>
      %c0_31 = arith.constant 0 : index
      %c0_32 = arith.constant 0 : index
      %59 = vector.load %arg3[%c0_31, %c0_32] : memref<1x1xf32, #tpu.memory_space<vmem>>, vector<1x1xf32>
      tpu.vector_store %arg3[%c0_31, %c0_32], %58 {strides = array<i32>} : memref<1x1xf32, #tpu.memory_space<vmem>>, vector<1x1xf32>,
      %cst_33 = arith.constant 0.000000e+00 : f32
      %60 = vector.broadcast %cst_33 : f32 to vector<1x1xf32>
      %c0_34 = arith.constant 0 : index
      %c0_35 = arith.constant 0 : index
      %61 = vector.load %arg4[%c0_34, %c0_35] : memref<1x1xf32, #tpu.memory_space<vmem>>, vector<1x1xf32>
      tpu.vector_store %arg4[%c0_34, %c0_35], %60 {strides = array<i32>} : memref<1x1xf32, #tpu.memory_space<vmem>>, vector<1x1xf32>,
      %cst_36 = arith.constant 0.000000e+00 : f32
      %62 = vector.broadcast %cst_36 : f32 to vector<1x1xf32>
      %c0_37 = arith.constant 0 : index
      %c0_38 = arith.constant 0 : index
      %63 = vector.load %arg2[%c0_37, %c0_38] : memref<1x1xf32, #tpu.memory_space<vmem>>, vector<1x1xf32>
      tpu.vector_store %arg2[%c0_37, %c0_38], %62 {strides = array<i32>} : memref<1x1xf32, #tpu.memory_space<vmem>>, vector<1x1xf32>,
      %64 = tpu.iota {dimensions = array<i32: 0>} : vector<128x128xi32>
      %65 = tpu.iota {dimensions = array<i32: 1>} : vector<128x128xi32>
      %66 = arith.cmpi sle, %64, %65 : vector<128x128xi32>
      %67 = arith.extui %66 : vector<128x128xi1> to vector<128x128xi32>
      %68 = arith.sitofp %67 : vector<128x128xi32> to vector<128x128xf32>
      %c0_39 = arith.constant 0 : index
      %c0_40 = arith.constant 0 : index
      %69 = vector.load %arg5[%c0_39, %c0_40] : memref<128x128xf32, #tpu.memory_space<vmem>>, vector<128x128xf32>
      tpu.vector_store %arg5[%c0_39, %c0_40], %68 {strides = array<i32>} : memref<128x128xf32, #tpu.memory_space<vmem>>, vector<128x128xf32>,
    } else {
    }
    %c0 = arith.constant 0 : index
    %c0_1 = arith.constant 0 : index
    %c0_2 = arith.constant 0 : index
    %3 = vector.load %arg1[%c0, %c0_1, %c0_2] : memref<2x8x128xf32, #tpu.memory_space<vmem>>, vector<1x8x128xf32>
    %4 = vector.shape_cast %3 : vector<1x8x128xf32> to vector<8x128xf32>
    %c1 = arith.constant 1 : index
    %c0_3 = arith.constant 0 : index
    %c0_4 = arith.constant 0 : index
    %5 = vector.load %arg1[%c1, %c0_3, %c0_4] : memref<2x8x128xf32, #tpu.memory_space<vmem>>, vector<1x8x128xf32>
    %6 = vector.shape_cast %5 : vector<1x8x128xf32> to vector<8x128xf32>
    %c0_5 = arith.constant 0 : index
    %c0_6 = arith.constant 0 : index
    %7 = vector.load %arg3[%c0_5, %c0_6] : memref<1x1xf32, #tpu.memory_space<vmem>>, vector<1x1xf32>
    %c0_7 = arith.constant 0 : index
    %c0_8 = arith.constant 0 : index
    %8 = vector.load %arg4[%c0_7, %c0_8] : memref<1x1xf32, #tpu.memory_space<vmem>>, vector<1x1xf32>
    %cst = arith.constant dense<0xFF800000> : vector<8xf32>
    %9 = vector.multi_reduction <maximumf>, %4, %cst [1] : vector<8x128xf32> to vector<8xf32>
    %10 = vector.shape_cast %9 : vector<8xf32> to vector<8x1xf32>
    %cst_9 = arith.constant dense<0xFF800000> : vector<1xf32>
    %11 = vector.multi_reduction <maximumf>, %10, %cst_9 [0] : vector<8x1xf32> to vector<1xf32>
    %12 = vector.shape_cast %11 : vector<1xf32> to vector<1x1xf32>
    %13 = arith.maximumf %7, %12 : vector<1x1xf32>
    %14 = vector.broadcast %13 : vector<1x1xf32> to vector<8x128xf32>
    %15 = arith.subf %4, %14 : vector<8x128xf32>
    %16 = math.exp %15 : vector<8x128xf32>
    %c0_10 = arith.constant 0 : index
    %c0_11 = arith.constant 0 : index
    %17 = vector.load %arg5[%c0_10, %c0_11] : memref<128x128xf32, #tpu.memory_space<vmem>>, vector<128x128xf32>
    %cst_12 = arith.constant dense<0.000000e+00> : vector<8x128xf32>
    %18 = tpu.matmul %16, %17, %cst_12 {dimension_numbers = #tpu.dot_dimension_numbers<[1], [0], [0], [1], [0, 0, 1, 1], [], []>} : vector<8x128xf32>, vector<128x128xf32>, vector<8x128xf32> -> vector<8x128xf32>
    %19 = tpu.iota {dimensions = array<i32: 0>} : vector<8x8xi32>
    %20 = tpu.iota {dimensions = array<i32: 1>} : vector<8x8xi32>
    %21 = arith.cmpi slt, %20, %19 : vector<8x8xi32>
    %22 = arith.extui %21 : vector<8x8xi1> to vector<8x8xi32>
    %23 = arith.sitofp %22 : vector<8x8xi32> to vector<8x8xf32>
    %cst_13 = arith.constant dense<0.000000e+00> : vector<8x128xf32>
    %24 = tpu.matmul %23, %16, %cst_13 {dimension_numbers = #tpu.dot_dimension_numbers<[1], [0], [0], [1], [0, 0, 1, 1], [], []>} : vector<8x8xf32>, vector<8x128xf32>, vector<8x128xf32> -> vector<8x128xf32>
    %cst_14 = arith.constant dense<0.000000e+00> : vector<8xf32>
    %25 = vector.multi_reduction <add>, %24, %cst_14 [1] : vector<8x128xf32> to vector<8xf32>
    %26 = vector.shape_cast %25 : vector<8xf32> to vector<8x1xf32>
    %27 = arith.subf %7, %13 : vector<1x1xf32>
    %28 = math.exp %27 : vector<1x1xf32>
    %29 = arith.mulf %8, %28 : vector<1x1xf32>
    %30 = vector.broadcast %26 : vector<8x1xf32> to vector<8x128xf32>
    %31 = arith.addf %18, %30 : vector<8x128xf32>
    %32 = vector.broadcast %29 : vector<1x1xf32> to vector<8x128xf32>
    %33 = arith.addf %31, %32 : vector<8x128xf32>
    %cst_15 = arith.constant 9.99999991E-38 : f32
    %34 = vector.broadcast %cst_15 : f32 to vector<8x128xf32>
    %35 = arith.maximumf %33, %34 : vector<8x128xf32>
    %36 = math.log %35 : vector<8x128xf32>
    %37 = vector.broadcast %13 : vector<1x1xf32> to vector<8x128xf32>
    %38 = arith.addf %37, %36 : vector<8x128xf32>
    %39 = arith.subf %38, %4 : vector<8x128xf32>
    %40 = arith.mulf %39, %6 : vector<8x128xf32>
    %cst_16 = arith.constant dense<0.000000e+00> : vector<8xf32>
    %41 = vector.multi_reduction <add>, %40, %cst_16 [1] : vector<8x128xf32> to vector<8xf32>
    %42 = vector.shape_cast %41 : vector<8xf32> to vector<8x1xf32>
    %cst_17 = arith.constant dense<0.000000e+00> : vector<1xf32>
    %43 = vector.multi_reduction <add>, %42, %cst_17 [0] : vector<8x1xf32> to vector<1xf32>
    %44 = vector.shape_cast %43 : vector<1xf32> to vector<1x1xf32>
    %c0_18 = arith.constant 0 : index
    %c0_19 = arith.constant 0 : index
    %45 = vector.load %arg2[%c0_18, %c0_19] : memref<1x1xf32, #tpu.memory_space<vmem>>, vector<1x1xf32>
    %46 = arith.addf %45, %44 : vector<1x1xf32>
    %c0_20 = arith.constant 0 : index
    %c0_21 = arith.constant 0 : index
    %47 = vector.load %arg2[%c0_20, %c0_21] : memref<1x1xf32, #tpu.memory_space<vmem>>, vector<1x1xf32>
    tpu.vector_store %arg2[%c0_20, %c0_21], %46 {strides = array<i32>} : memref<1x1xf32, #tpu.memory_space<vmem>>, vector<1x1xf32>,
    %cst_22 = arith.constant dense<0.000000e+00> : vector<8xf32>
    %48 = vector.multi_reduction <add>, %16, %cst_22 [1] : vector<8x128xf32> to vector<8xf32>
    %49 = vector.shape_cast %48 : vector<8xf32> to vector<8x1xf32>
    %cst_23 = arith.constant dense<0.000000e+00> : vector<1xf32>
    %50 = vector.multi_reduction <add>, %49, %cst_23 [0] : vector<8x1xf32> to vector<1xf32>
    %51 = vector.shape_cast %50 : vector<1xf32> to vector<1x1xf32>
    %c0_24 = arith.constant 0 : index
    %c0_25 = arith.constant 0 : index
    %52 = vector.load %arg3[%c0_24, %c0_25] : memref<1x1xf32, #tpu.memory_space<vmem>>, vector<1x1xf32>
    tpu.vector_store %arg3[%c0_24, %c0_25], %13 {strides = array<i32>} : memref<1x1xf32, #tpu.memory_space<vmem>>, vector<1x1xf32>,
    %53 = arith.addf %29, %51 : vector<1x1xf32>
    %c0_26 = arith.constant 0 : index
    %c0_27 = arith.constant 0 : index
    %54 = vector.load %arg4[%c0_26, %c0_27] : memref<1x1xf32, #tpu.memory_space<vmem>>, vector<1x1xf32>
    tpu.vector_store %arg4[%c0_26, %c0_27], %53 {strides = array<i32>} : memref<1x1xf32, #tpu.memory_space<vmem>>, vector<1x1xf32>,
    %c0_i32_28 = arith.constant 0 : i32
    %55 = arith.cmpi eq, %arg0, %c0_i32_28 : i32
    %56 = arith.extui %55 : i1 to i32
    %c0_i32_29 = arith.constant 0 : i32
    %57 = arith.cmpi ne, %56, %c0_i32_29 : i32
    scf.if %57 {
      %c0_30 = arith.constant 0 : index
      %c0_31 = arith.constant 0 : index
      %58 = vector.load %arg2[%c0_30, %c0_31] : memref<1x1xf32, #tpu.memory_space<vmem>>, vector<1x1xf32>
      %cst_32 = arith.constant 1.250000e-01 : f32
      %59 = vector.broadcast %cst_32 : f32 to vector<1x1xf32>
      %60 = arith.mulf %58, %59 : vector<1x1xf32>
      %c0_33 = arith.constant 0 : index
      %c0_34 = arith.constant 0 : index
      %61 = vector.load %arg2[%c0_33, %c0_34] : memref<1x1xf32, #tpu.memory_space<vmem>>, vector<1x1xf32>
      tpu.vector_store %arg2[%c0_33, %c0_34], %60 {strides = array<i32>} : memref<1x1xf32, #tpu.memory_space<vmem>>, vector<1x1xf32>,
    } else {
    }
    return
  }
  func.func @transform_0(%arg0: i32) -> (i32, i32, i32) {
    %c0_i32 = arith.constant 0 : i32
    %c0_i32_0 = arith.constant 0 : i32
    %c0_i32_1 = arith.constant 0 : i32
    return %c0_i32, %arg0, %c0_i32_0 : i32, i32, i32
  }
  func.func @transform_1(%arg0: i32) -> (i32, i32) {
    %c0_i32 = arith.constant 0 : i32
    %c0_i32_0 = arith.constant 0 : i32
    %c0_i32_1 = arith.constant 0 : i32
    return %c0_i32, %c0_i32_0 : i32, i32
  }
}

</mosaic_0001>

<llo_original>
// kernel: tpu_custom_call.1
$region0: #{tpu_custom_call.1}
  #allocation0 [shape = 'u32[]', space=smem, size = 0x4, offset = 0x4, fixed_abs, tag = 'smem constant byte address 0x4 - core index']
  #allocation1 [shape = 'u32[144,128]{1,0:T(1,128)}', space=vmem, size = 0x12000, scoped, tag = 'internal scratch']
  #allocation2 [shape = 'f32[1,1]{1,0:T(1,128)}', space=vmem, size = 0x200, scoped, tag = 'scratch operand']
  #allocation3 [shape = 'f32[1,1]{1,0:T(1,128)}', space=vmem, size = 0x200, scoped, tag = 'scratch operand']
  #allocation4 [shape = 'f32[128,128]{1,0:T(8,128)}', space=vmem, size = 0x10000, scoped, tag = 'scratch operand']
  %s0 = inlined_call_operand.hbm [shape: f32[2,8,128], index: 0, kind: input, shape index: {}]
  %s1 = inlined_call_operand.hbm [shape: f32[1,1], index: 1, kind: output, shape index: {}]
  %s2 = sld [smem:[#allocation0]]
  $region26: #{tpu_custom_call.1} parent=0
    _
  %s4 = ssub.s32 1, %s2
  %s5 = scalar_select 0, %s4, %s2
  $region1: #{tpu_custom_call.1} parent=0
    #allocation5 [shape = 'u8[8192]{0}', space=vmem, size = 0x2000, scoped, tag = 'input window, operand 0, single buffered']
    #allocation6 [shape = 's32[1]{0}', space=sflag, size = 0x4, scoped, tag = 'scoped memory for tpu_custom_call.1']
    #allocation7 [shape = 's32[1]{0}', space=sflag, size = 0x4, scoped, tag = 'scoped memory for tpu_custom_call.1']
    #allocation8 [shape = 'u8[512]{0}', space=vmem, size = 0x400, scoped, tag = 'output window, operand 0, single buffered']
    %6 = vsyncpa [#allocation6], 0
    %7 = vsyncpa [#allocation7], 0
    // Predicated region
    $region2: #{tpu_custom_call.1} parent=1 // pred_check
      _
    $region3: #{tpu_custom_call.1} parent=1 // pred_check_branch
      %9 = sbr.rel (0) target = $region5
    $region4: #{tpu_custom_call.1} parent=1 // pred_region
      %s11 = ssub.s32 256, 256
      %12 = vsyncadd [#allocation6], %s11
      %s13 = sshll.u32 [#allocation5], 4
      %s14 = int_to_ptr.vmem [resolvable:$true] %s13
      %19 = dma.hbm_to_vmem [thread:$0]  %s0, 256, %s14, [#allocation6], 128, 128, 8
    $region5: #{tpu_custom_call.1} parent=1 // pred_fallthru
      _
    // Predicated region
    $region6: #{tpu_custom_call.1} parent=1 // pred_check
      _
    $region7: #{tpu_custom_call.1} parent=1 // pred_check_branch
      %21 = sbr.rel (0) target = $region9
    $region8: #{tpu_custom_call.1} parent=1 // pred_region
      %22 = dma.done [#allocation6], 256
    $region9: #{tpu_custom_call.1} parent=1 // pred_fallthru
      _
    %p23 = scmp.eq.s32.totalorder 0, 0
    // Predicated region
    $region10: #{tpu_custom_call.1} parent=1 // pred_check
      %p24 = pneg %p23
    $region11: #{tpu_custom_call.1} parent=1 // pred_check_branch
      %26 = sbr.rel (%p24) target = $region13
    $region12: #{tpu_custom_call.1} parent=1 // pred_region
      %vm27 = vcmask 0
      %28 = vst.msk [vmem:[#allocation2] sm:$0x1] %vm27, -inf
      %29 = vst.msk [vmem:[#allocation3] sm:$0x1] %vm27, 0.0
      %30 = vst.msk [vmem:[#allocation8] sm:$0x1] %vm27, 0.0
      %v31 = vlaneseq
      %v32 = vshrl.u32 %v31, 7
      %v33 = vadd.s32 %v32, 8
      %v34 = vadd.s32 %v32, 16
      %v35 = vadd.s32 %v32, 24
      %v36 = vadd.s32 %v32, 32
      %v37 = vadd.s32 %v32, 40
      %v38 = vadd.s32 %v32, 48
      %v39 = vadd.s32 %v32, 56
      %v40 = vadd.s32 %v32, 64
      %v41 = vadd.s32 %v32, 72
      %v42 = vadd.s32 %v32, 80
      %v43 = vadd.s32 %v32, 88
      %v44 = vadd.s32 %v32, 96
      %v45 = vadd.s32 %v32, 104
      %v46 = vadd.s32 %v32, 112
      %v47 = vadd.s32 %v32, 120
      %v48 = vlaneseq
      %v49 = vand.u32 %v48, 127
      %vm50 = vcmp.le.s32.totalorder %v32, %v49
      %vm51 = vcmp.le.s32.totalorder %v33, %v49
      %vm52 = vcmp.le.s32.totalorder %v34, %v49
      %vm53 = vcmp.le.s32.totalorder %v35, %v49
      %vm54 = vcmp.le.s32.totalorder %v36, %v49
      %vm55 = vcmp.le.s32.totalorder %v37, %v49
      %vm56 = vcmp.le.s32.totalorder %v38, %v49
      %vm57 = vcmp.le.s32.totalorder %v39, %v49
      %vm58 = vcmp.le.s32.totalorder %v40, %v49
      %vm59 = vcmp.le.s32.totalorder %v41, %v49
      %vm60 = vcmp.le.s32.totalorder %v42, %v49
      %vm61 = vcmp.le.s32.totalorder %v43, %v49
      %vm62 = vcmp.le.s32.totalorder %v44, %v49
      %vm63 = vcmp.le.s32.totalorder %v45, %v49
      %vm64 = vcmp.le.s32.totalorder %v46, %v49
      %vm65 = vcmp.le.s32.totalorder %v47, %v49
      %v66 = vsel %vm50, 1, 0
      %v67 = vsel %vm51, 1, 0
      %v68 = vsel %vm52, 1, 0
      %v69 = vsel %vm53, 1, 0
      %v70 = vsel %vm54, 1, 0
      %v71 = vsel %vm55, 1, 0
      %v72 = vsel %vm56, 1, 0
      %v73 = vsel %vm57, 1, 0
      %v74 = vsel %vm58, 1, 0
      %v75 = vsel %vm59, 1, 0
      %v76 = vsel %vm60, 1, 0
      %v77 = vsel %vm61, 1, 0
      %v78 = vsel %vm62, 1, 0
      %v79 = vsel %vm63, 1, 0
      %v80 = vsel %vm64, 1, 0
      %v81 = vsel %vm65, 1, 0
      %v82 = vcvt.s32.f32 %v66
      %v83 = vcvt.s32.f32 %v67
      %v84 = vcvt.s32.f32 %v68
      %v85 = vcvt.s32.f32 %v69
      %v86 = vcvt.s32.f32 %v70
      %v87 = vcvt.s32.f32 %v71
      %v88 = vcvt.s32.f32 %v72
      %v89 = vcvt.s32.f32 %v73
      %v90 = vcvt.s32.f32 %v74
      %v91 = vcvt.s32.f32 %v75
      %v92 = vcvt.s32.f32 %v76
      %v93 = vcvt.s32.f32 %v77
      %v94 = vcvt.s32.f32 %v78
      %v95 = vcvt.s32.f32 %v79
      %v96 = vcvt.s32.f32 %v80
      %v97 = vcvt.s32.f32 %v81
      %98 = vst [vmem:[#allocation4] sm:$0xff] %v82
      %99 = vst [vmem:[#allocation4 + $0x8] sm:$0xff] %v83
      %100 = vst [vmem:[#allocation4 + $0x10] sm:$0xff] %v84
      %101 = vst [vmem:[#allocation4 + $0x18] sm:$0xff] %v85
      %102 = vst [vmem:[#allocation4 + $0x20] sm:$0xff] %v86
      %103 = vst [vmem:[#allocation4 + $0x28] sm:$0xff] %v87
      %104 = vst [vmem:[#allocation4 + $0x30] sm:$0xff] %v88
      %105 = vst [vmem:[#allocation4 + $0x38] sm:$0xff] %v89
      %106 = vst [vmem:[#allocation4 + $0x40] sm:$0xff] %v90
      %107 = vst [vmem:[#allocation4 + $0x48] sm:$0xff] %v91
      %108 = vst [vmem:[#allocation4 + $0x50] sm:$0xff] %v92
      %109 = vst [vmem:[#allocation4 + $0x58] sm:$0xff] %v93
      %110 = vst [vmem:[#allocation4 + $0x60] sm:$0xff] %v94
      %111 = vst [vmem:[#allocation4 + $0x68] sm:$0xff] %v95
      %112 = vst [vmem:[#allocation4 + $0x70] sm:$0xff] %v96
      %113 = vst [vmem:[#allocation4 + $0x78] sm:$0xff] %v97
    $region13: #{tpu_custom_call.1} parent=1 // pred_fallthru
      _
    %v114 = vld [vmem:[#allocation5] sm:$0xff]
    %s115 = scalar_lea.vmem [#allocation5], 8
    %v116 = vld [vmem:[%s115] sm:$0xff]
    %v117 = vld [vmem:[#allocation2] sm:$0x1]
    %v118 = vld [vmem:[#allocation3] sm:$0x1]
    %119 = vmax.xlane.f32.xlu0 %v114
    %v120 = vpop.xlane.xlu0 %119
    %v121 = vrot.slane %v120, 4
    %v122 = vmax.f32 %v120, %v121
    %v123 = vrot.slane %v122, 2
    %v124 = vmax.f32 %v122, %v123
    %v125 = vrot.slane %v124, 1
    %v126 = vmax.f32 %v124, %v125
    %v127 = vmax.f32 %v117, %v126
    %v129 = vlaneseq
    %v130 = vshrl.u32 %v129, 7
    %v131 = vsub.s32 0, %v130
    %v132 = vrot.slane %v127, %v131
    %133 = vset.pattern.permute.xlu0 0
    %134 = vperm.xlu0 %133, %v132
    %v135 = vpop.permute.xlu0 %134
    %v137 = vsub.f32 %v114, %v135
    %v138 = vmul.f32 %v137, 1.442695
    %v139 = vpow.pop %v138
    %v140 = vld [vmem:[#allocation4] sm:$0xff]
    %v141 = vld [vmem:[#allocation4 + $0x8] sm:$0xff]
    %v142 = vld [vmem:[#allocation4 + $0x10] sm:$0xff]
    %v143 = vld [vmem:[#allocation4 + $0x18] sm:$0xff]
    %v144 = vld [vmem:[#allocation4 + $0x20] sm:$0xff]
    %v145 = vld [vmem:[#allocation4 + $0x28] sm:$0xff]
    %v146 = vld [vmem:[#allocation4 + $0x30] sm:$0xff]
    %v147 = vld [vmem:[#allocation4 + $0x38] sm:$0xff]
    %v148 = vld [vmem:[#allocation4 + $0x40] sm:$0xff]
    %v149 = vld [vmem:[#allocation4 + $0x48] sm:$0xff]
    %v150 = vld [vmem:[#allocation4 + $0x50] sm:$0xff]
    %v151 = vld [vmem:[#allocation4 + $0x58] sm:$0xff]
    %v152 = vld [vmem:[#allocation4 + $0x60] sm:$0xff]
    %v153 = vld [vmem:[#allocation4 + $0x68] sm:$0xff]
    %v154 = vld [vmem:[#allocation4 + $0x70] sm:$0xff]
    %v155 = vld [vmem:[#allocation4 + $0x78] sm:$0xff]
    %v156 = vlaneseq
    %v157 = vshrl.u32 %v156, 7
    %v158 = vlaneseq
    %v159 = vand.u32 %v158, 127
    %vm160 = vcmp.lt.s32.totalorder %v159, %v157
    %v161 = vsel %vm160, 1, 0
    %v162 = vcvt.s32.f32 %v161
    %vm163 = vcmask 64512
    %v165 = vsel %vm163, %v162, 0
    %167 = vmatprep.subr.mxu0 0.0
    %168 = vmatpush1.msra.mxu0 %v139
    %169 = vmatprep.subr.mxu0 0.0
    %170 = vmatpush1.msra.mxu0 0.0
    %171 = vmatprep.subr.mxu0 0.0
    %172 = vmatpush1.msra.mxu0 0.0
    %173 = vmatprep.subr.mxu0 0.0
    %174 = vmatpush1.msra.mxu0 0.0
    %175 = vmatprep.subr.mxu0 0.0
    %176 = vmatpush1.msra.mxu0 0.0
    %177 = vmatprep.subr.mxu0 0.0
    %178 = vmatpush1.msra.mxu0 0.0
    %179 = vmatprep.subr.mxu0 0.0
    %180 = vmatpush1.msra.mxu0 0.0
    %181 = vmatprep.subr.mxu0 0.0
    %182 = vmatpush1.msra.mxu0 0.0
    %183 = vmatprep.subr.mxu0 0.0
    %184 = vmatpush1.msra.mxu0 0.0
    %185 = vmatprep.subr.mxu0 0.0
    %186 = vmatpush1.msra.mxu0 0.0
    %187 = vmatprep.subr.mxu0 0.0
    %188 = vmatpush1.msra.mxu0 0.0
    %189 = vmatprep.subr.mxu0 0.0
    %190 = vmatpush1.msra.mxu0 0.0
    %191 = vmatprep.subr.mxu0 0.0
    %192 = vmatpush1.msra.mxu0 0.0
    %193 = vmatprep.subr.mxu0 0.0
    %194 = vmatpush1.msra.mxu0 0.0
    %195 = vmatprep.subr.mxu0 0.0
    %196 = vmatpush1.msra.mxu0 0.0
    %197 = vmatprep.subr.mxu0 0.0
    %198 = vmatpush1.msra.mxu0 0.0
    %199 = vmatprep.subr.mxu0 0.0
    %200 = vmatpush1.msra.mxu0 0.0
    %201 = vmatprep.subr.mxu0 0.0
    %202 = vmatpush1.msra.mxu0 0.0
    %203 = vmatprep.subr.mxu0 0.0
    %204 = vmatpush1.msra.mxu0 0.0
    %205 = vmatprep.subr.mxu0 0.0
    %206 = vmatpush1.msra.mxu0 0.0
    %207 = vmatprep.subr.mxu0 0.0
    %208 = vmatpush1.msra.mxu0 0.0
    %209 = vmatprep.subr.mxu0 0.0
    %210 = vmatpush1.msra.mxu0 0.0
    %211 = vmatprep.subr.mxu0 0.0
    %212 = vmatpush1.msra.mxu0 0.0
    %213 = vmatprep.subr.mxu0 0.0
    %214 = vmatpush1.msra.mxu0 0.0
    %215 = vmatprep.subr.mxu0 0.0
    %216 = vmatpush1.msra.mxu0 0.0
    %217 = vmatprep.subr.mxu0 0.0
    %218 = vmatpush1.msra.mxu0 0.0
    %219 = vmatprep.subr.mxu0 0.0
    %220 = vmatpush1.msra.mxu0 0.0
    %221 = vmatprep.subr.mxu0 0.0
    %222 = vmatpush1.msra.mxu0 0.0
    %223 = vmatprep.subr.mxu0 0.0
    %224 = vmatpush1.msra.mxu0 0.0
    %225 = vmatprep.subr.mxu0 0.0
    %226 = vmatpush1.msra.mxu0 0.0
    %227 = vmatprep.subr.mxu0 0.0
    %228 = vmatpush1.msra.mxu0 0.0
    %229 = vmatprep.subr.mxu0 0.0
    %230 = vmatpush1.msra.mxu0 0.0
    %231 = vmatprep.mubr.f32.mxu0 0.0
    %232 = vmatmul.mubr.f32.gmra.mrb[0].mxu0 %v165
    %v233 = vpop.f32.mrb[0].mxu0
    %v234 = vadd.f32 0.0, %v233
    %v235 = vpop.f32.mrb[0].mxu0
    %236 = vdwg.mxu0
    %237 = vadd.xlane.f32.xlu0 %v234
    %v238 = vpop.xlane.xlu0 %237
    %v239 = vsub.f32 %v117, %v127
    %v240 = vmul.f32 %v239, 1.442695
    %v241 = vpow.pop %v240
    %v242 = vmul.f32 %v118, %v241
    %243 = vmatprep.subr.mxu0 0.0
    %244 = vmatpush1.msra.mxu0 %v140
    %245 = vmatprep.subr.mxu0 0.0
    %246 = vmatpush1.msra.mxu0 %v141
    %247 = vmatprep.subr.mxu0 0.0
    %248 = vmatpush1.msra.mxu0 %v142
    %249 = vmatprep.subr.mxu0 0.0
    %250 = vmatpush1.msra.mxu0 %v143
    %251 = vmatprep.subr.mxu0 0.0
    %252 = vmatpush1.msra.mxu0 %v144
    %253 = vmatprep.subr.mxu0 0.0
    %254 = vmatpush1.msra.mxu0 %v145
    %255 = vmatprep.subr.mxu0 0.0
    %256 = vmatpush1.msra.mxu0 %v146
    %257 = vmatprep.subr.mxu0 0.0
    %258 = vmatpush1.msra.mxu0 %v147
    %259 = vmatprep.subr.mxu0 0.0
    %260 = vmatpush1.msra.mxu0 %v148
    %261 = vmatprep.subr.mxu0 0.0
    %262 = vmatpush1.msra.mxu0 %v149
    %263 = vmatprep.subr.mxu0 0.0
    %264 = vmatpush1.msra.mxu0 %v150
    %265 = vmatprep.subr.mxu0 0.0
    %266 = vmatpush1.msra.mxu0 %v151
    %267 = vmatprep.subr.mxu0 0.0
    %268 = vmatpush1.msra.mxu0 %v152
    %269 = vmatprep.subr.mxu0 0.0
    %270 = vmatpush1.msra.mxu0 %v153
    %271 = vmatprep.subr.mxu0 0.0
    %272 = vmatpush1.msra.mxu0 %v154
    %273 = vmatprep.subr.mxu0 0.0
    %274 = vmatpush1.msra.mxu0 %v155
    %275 = vmatprep.subr.mxu0 0.0
    %276 = vmatpush1.msra.mxu0 0.0
    %277 = vmatprep.subr.mxu0 0.0
    %278 = vmatpush1.msra.mxu0 0.0
    %279 = vmatprep.subr.mxu0 0.0
    %280 = vmatpush1.msra.mxu0 0.0
    %281 = vmatprep.subr.mxu0 0.0
    %282 = vmatpush1.msra.mxu0 0.0
    %283 = vmatprep.subr.mxu0 0.0
    %284 = vmatpush1.msra.mxu0 0.0
    %285 = vmatprep.subr.mxu0 0.0
    %286 = vmatpush1.msra.mxu0 0.0
    %287 = vmatprep.subr.mxu0 0.0
    %288 = vmatpush1.msra.mxu0 0.0
    %289 = vmatprep.subr.mxu0 0.0
    %290 = vmatpush1.msra.mxu0 0.0
    %291 = vmatprep.subr.mxu0 0.0
    %292 = vmatpush1.msra.mxu0 0.0
    %293 = vmatprep.subr.mxu0 0.0
    %294 = vmatpush1.msra.mxu0 0.0
    %295 = vmatprep.subr.mxu0 0.0
    %296 = vmatpush1.msra.mxu0 0.0
    %297 = vmatprep.subr.mxu0 0.0
    %298 = vmatpush1.msra.mxu0 0.0
    %299 = vmatprep.subr.mxu0 0.0
    %300 = vmatpush1.msra.mxu0 0.0
    %301 = vmatprep.subr.mxu0 0.0
    %302 = vmatpush1.msra.mxu0 0.0
    %303 = vmatprep.subr.mxu0 0.0
    %304 = vmatpush1.msra.mxu0 0.0
    %305 = vmatprep.subr.mxu0 0.0
    %306 = vmatpush1.msra.mxu0 0.0
    %307 = vmatprep.mubr.f32.mxu0 0.0
    %308 = vmatmul.mubr.f32.gmra.mrb[0].mxu0 %v139
    %v309 = vpop.f32.mrb[0].mxu0
    %v310 = vadd.f32 %v238, %v309
    %v311 = vpop.f32.mrb[0].mxu0
    %312 = vdwg.mxu0
    %v314 = vlaneseq
    %v315 = vshrl.u32 %v314, 7
    %v316 = vsub.s32 0, %v315
    %v317 = vrot.slane %v242, %v316
    %318 = vset.pattern.permute.xlu0 0
    %319 = vperm.xlu0 %318, %v317
    %v320 = vpop.permute.xlu0 %319
    %v322 = vadd.f32 %v310, %v320
    %v323 = vmax.f32 %v322, 1e-37
    %v324 = vlog2.pop %v323
    %v325 = vmul.f32 %v324, 0.6931472
    %v326 = vadd.f32 %v135, %v325
    %v327 = vsub.f32 %v326, %v114
    %v328 = vmul.f32 %v327, %v116
    %329 = vadd.xlane.f32.xlu0 %v328
    %v330 = vpop.xlane.xlu0 %329
    %v331 = vrot.slane %v330, 4
    %v332 = vadd.f32 %v330, %v331
    %v333 = vrot.slane %v332, 2
    %v334 = vadd.f32 %v332, %v333
    %v335 = vrot.slane %v334, 1
    %v336 = vadd.f32 %v334, %v335
    %v337 = vld [vmem:[#allocation8] sm:$0x1]
    %v338 = vadd.f32 %v337, %v336
    %vm339 = vcmask 0
    %340 = vst.msk [vmem:[#allocation8] sm:$0x1] %vm339, %v338
    %341 = vadd.xlane.f32.xlu0 %v139
    %v342 = vpop.xlane.xlu0 %341
    %v343 = vrot.slane %v342, 4
    %v344 = vadd.f32 %v342, %v343
    %v345 = vrot.slane %v344, 2
    %v346 = vadd.f32 %v344, %v345
    %v347 = vrot.slane %v346, 1
    %v348 = vadd.f32 %v346, %v347
    %349 = vst.msk [vmem:[#allocation2] sm:$0x1] %vm339, %v127
    %v350 = vadd.f32 %v242, %v348
    %351 = vst.msk [vmem:[#allocation3] sm:$0x1] %vm339, %v350
    // Predicated region
    $region14: #{tpu_custom_call.1} parent=1 // pred_check
      %p352 = pneg %p23
    $region15: #{tpu_custom_call.1} parent=1 // pred_check_branch
      %354 = sbr.rel (%p352) target = $region17
    $region16: #{tpu_custom_call.1} parent=1 // pred_region
      %v355 = vld [vmem:[#allocation8] sm:$0x1]
      %v356 = vmul.f32 %v355, 0.125
      %357 = vst.msk [vmem:[#allocation8] sm:$0x1] %vm339, %v356
    $region17: #{tpu_custom_call.1} parent=1 // pred_fallthru
      _
    // Predicated region
    $region18: #{tpu_custom_call.1} parent=1 // pred_check
      _
    $region19: #{tpu_custom_call.1} parent=1 // pred_check_branch
      %359 = sbr.rel (0) target = $region21
    $region20: #{tpu_custom_call.1} parent=1 // pred_region
      %s361 = ssub.s32 16, 16
      %362 = vsyncadd [#allocation7], %s361
      %s364 = sshll.u32 [#allocation8], 4
      %s365 = int_to_ptr.vmem [resolvable:$true] %s364
      %367 = dma.vmem_to_hbm [thread:$0]  %s365, 16, %s1, [#allocation7]
    $region21: #{tpu_custom_call.1} parent=1 // pred_fallthru
      _
    // Predicated region
    $region22: #{tpu_custom_call.1} parent=1 // pred_check
      _
    $region23: #{tpu_custom_call.1} parent=1 // pred_check_branch
      %369 = sbr.rel (0) target = $region25
    $region24: #{tpu_custom_call.1} parent=1 // pred_region
      %370 = dma.done [#allocation7], 16
    $region25: #{tpu_custom_call.1} parent=1 // pred_fallthru
      _
    %371 = vsyncpa [#allocation6], 1
    %372 = vsyncpa [#allocation7], 1

</llo_original>
